<compile_context>
chip_gen: v6e
topology: v6e:2x2x1
jax: 0.10.0
libtpu: 0.0.40
codegen_flags: <defaults>
</compile_context>

<pallas_src>
import jax
import jax.numpy as jnp
from jax.experimental import pallas as pl
from jax.experimental.pallas import tpu as pltpu


# ---------------------------------------------------------------------------
# Packed-parameter layout (flat f32[20] in SMEM)
# ---------------------------------------------------------------------------
_W123 = 0     # 6: x-feature columns of fc1/fc2/fc3 weights: [w1_0,w1_1,w2_0,w2_1,w3_0,w3_1]
_B123 = 6     # 3: effective fc1/2/3 biases (embedding contribution folded in)
_W4 = 9       # 6: fc4 weight, row-major (2 out, 3 in)
_B4 = 15      # 2: fc4 bias
_WD5 = 17     # 2: fc5 weight row difference (row0 - row1)
_BD5 = 19     # 1: fc5 bias difference (b5[0] - b5[1])
_NPARAMS = 20


def _mlp_kernel(p_ref, x_ref, out_ref):
    """One batch tile.

    p_ref:   SMEM f32[20]                packed parameters (layout above)
    x_ref:   VMEM f32[2, tile_rows, 128] inputs, batch on sublanes+lanes
    out_ref: VMEM f32[2, tile_rows, 128] softmax probabilities
    """
    x0 = x_ref[0]                           # (tile_rows, 128) feature 0
    x1 = x_ref[1]                           # (tile_rows, 128) feature 1

    # --- fc1/fc2/fc3 fused (4 -> 3) + ReLU --------------------------------
    # Embedding part of the concatenated input is constant across the batch
    # and is already folded into the packed effective biases.
    h = []
    for i in range(3):                      # static unroll, VPU broadcast-MAC
        w = _W123 + 2 * i
        hi = p_ref[_B123 + i] + p_ref[w] * x0 + p_ref[w + 1] * x1
        h.append(jnp.maximum(hi, 0.0))      # (tile_rows, 128)

    # --- fc4 (3 -> 2) + ReLU -----------------------------------------------
    y = []
    for j in range(2):
        w = _W4 + 3 * j
        yj = (p_ref[_B4 + j]
              + p_ref[w + 0] * h[0]
              + p_ref[w + 1] * h[1]
              + p_ref[w + 2] * h[2])
        y.append(jnp.maximum(yj, 0.0))      # (tile_rows, 128)

    # --- fc5 folded into a single logit difference ld = l0 - l1 -------------
    ld = p_ref[_BD5] + p_ref[_WD5 + 0] * y[0] + p_ref[_WD5 + 1] * y[1]
    ld = jnp.minimum(ld, 80.0)              # guard exp overflow -> NaN

    # --- 2-class softmax as a sigmoid (no cross-lane XLU reduce) -------------
    #   p1 = 1 / (1 + exp(l0 - l1)),  p0 = 1 - p1
    d = 1.0 + jnp.exp(ld)                   # exp on the EUP
    r = pl.reciprocal(d, approx=True)       # approximate reciprocal on the EUP
    r = r * (2.0 - d * r)                   # one Newton step -> ~f32 accuracy
    out_ref[1] = r                          # full unmasked slab stores
    out_ref[0] = 1.0 - r


# ---------------------------------------------------------------------------
# Host-side packing / tiling helpers
# ---------------------------------------------------------------------------
def pack_params(params):
    """Flatten parameters into f32[20] matching the SMEM layout.

    Folds the bayesian embedding into the fc1/2/3 effective biases and fc5
    into a single logit-difference (row diff + bias diff).  Re-pack after any
    call equivalent to set_bayesian_embedding.
    """
    w123 = params["w123"].astype(jnp.float32)          # (3, 4)
    b123 = params["b123"].astype(jnp.float32)          # (3,)
    emb = params["embedding"].astype(jnp.float32)      # (2,)
    b_eff = b123 + w123[:, 2:4] @ emb                  # (3,)

    w5 = params["w5"].astype(jnp.float32)              # (2, 2)
    b5 = params["b5"].astype(jnp.float32)               # (2,)
    wd5 = w5[0] - w5[1]                                 # (2,)
    bd5 = (b5[0] - b5[1]).reshape(1)                    # (1,)

    flat = jnp.concatenate([
        w123[:, 0:2].reshape(-1),                       # 6
        b_eff.reshape(-1),                              # 3
        params["w4"].astype(jnp.float32).reshape(-1),   # 6
        params["b4"].astype(jnp.float32).reshape(-1),   # 2
        wd5.reshape(-1),                                # 2
        bd5,                                            # 1
    ])
    assert flat.shape == (_NPARAMS,)
    return flat


def _round_up(a, m):
    return ((a + m - 1) // m) * m


def _choose_tiling(batch, max_tile_rows=1024):
    """Pick (rows_pad, tile_rows, n_tiles) for a (2, rows, 128) layout.

    * tile_rows multiple of 8 (or equal to the full rows dim for tiny batches)
    * ~1 MiB of input per grid step when the batch is large
    * >= 2 grid steps when possible so both v7x TensorCores get work
    """
    rows = _round_up(max(batch, 1), 128) // 128
    if rows < 16:                           # tiny batch: single full block
        return rows, rows, 1
    n_tiles = max(2, -(-rows // max_tile_rows))
    tile_rows = _round_up(-(-rows // n_tiles), 8)
    rows_pad = tile_rows * n_tiles
    return rows_pad, tile_rows, n_tiles


# ---------------------------------------------------------------------------
# Forward wrappers
# ---------------------------------------------------------------------------
def classifier_mlp_forward_fm(x_fm, flat_params, *, max_tile_rows=1024):
    """Feature-major forward (preferred, no transposes).

    x_fm: (2, B) float32, flat_params: f32[20] from pack_params.
    Returns (2, B) softmax probabilities (row 0 = class 0, row 1 = class 1).
    """
    assert x_fm.shape[0] == 2
    B = x_fm.shape[1]
    rows_pad, tile_rows, n_tiles = _choose_tiling(B, max_tile_rows)
    b_pad = rows_pad * 128

    x_fm = x_fm.astype(jnp.float32)
    if b_pad != B:
        x_fm = jnp.pad(x_fm, ((0, 0), (0, b_pad - B)))
    x3 = x_fm.reshape(2, rows_pad, 128)     # contiguous (free) reshape

    out3 = pl.pallas_call(
        _mlp_kernel,
        out_shape=jax.ShapeDtypeStruct((2, rows_pad, 128), jnp.float32),
        grid=(n_tiles,),
        in_specs=[
            # all parameters: one small flat buffer in SMEM (no VMEM tiles)
            pl.BlockSpec(memory_space=pltpu.MemorySpace.SMEM),
            # inputs: (2, tile_rows, 128) slab, batch on sublanes+lanes
            pl.BlockSpec((2, tile_rows, 128), lambda i: (0, i, 0)),
        ],
        out_specs=pl.BlockSpec((2, tile_rows, 128), lambda i: (0, i, 0)),
        compiler_params=pltpu.CompilerParams(
            dimension_semantics=("parallel",)),
    )(flat_params, x3)

    return out3.reshape(2, b_pad)[:, :B]


def classifier_mlp_forward(x, params, *, max_tile_rows=1024):
    """Sample-major compatibility wrapper.

    x: (B, 2) or (2,) (the original single-sample PyTorch API).
    NOTE: this path transposes in the wrapper; prefer classifier_mlp_forward_fm
    with feature-major (2, B) data to avoid the extra HBM passes.
    """
    single = (x.ndim == 1)
    if single:
        x = x.reshape(1, 2)
    flat = pack_params(params)
    out_fm = classifier_mlp_forward_fm(
        x.astype(jnp.float32).T, flat, max_tile_rows=max_tile_rows)
    out = out_fm.T                          # (B, 2)
    return out.reshape(2) if single else out


# ---------------------------------------------------------------------------
# Init + plain-JAX reference
# ---------------------------------------------------------------------------
def init_params(key):
    """Deterministic init mimicking PyTorch nn.Linear default:
    U(-1/sqrt(fan_in), 1/sqrt(fan_in)) for weights and biases."""
    keys = jax.random.split(key, 10)

    def linear(kw, kb, fan_in, fan_out):
        bound = 1.0 / float(jnp.sqrt(float(fan_in)))
        w = jax.random.uniform(kw, (fan_out, fan_in), jnp.float32, -bound, bound)
        b = jax.random.uniform(kb, (fan_out,), jnp.float32, -bound, bound)
        return w, b

    w1, b1 = linear(keys[0], keys[1], 4, 1)   # fc1
    w2, b2 = linear(keys[2], keys[3], 4, 1)   # fc2
    w3, b3 = linear(keys[4], keys[5], 4, 1)   # fc3
    w4, b4 = linear(keys[6], keys[7], 3, 2)   # fc4
    w5, b5 = linear(keys[8], keys[9], 2, 2)   # fc5

    return {
        "w123": jnp.concatenate([w1, w2, w3], axis=0),   # (3, 4) fused fc1/2/3
        "b123": jnp.concatenate([b1, b2, b3], axis=0),   # (3,)
        "w4": w4,                                        # (2, 3)
        "b4": b4,                                        # (2,)
        "w5": w5,                                        # (2, 2)
        "b5": b5,                                        # (2,)
        # self.bayesian_embedding (settable via set_bayesian_embedding in torch)
        "embedding": jnp.array([1.0, 0.0], dtype=jnp.float32),
    }


def reference_forward(x, params):
    """Plain-JAX reference (exact softmax) for sanity checking. x: (B,2) or (2,)."""
    x2 = jnp.atleast_2d(x).astype(jnp.float32)                   # (B, 2)
    emb = jnp.broadcast_to(params["embedding"], (x2.shape[0], 2))
    xc = jnp.concatenate([x2, emb], axis=1)                      # (B, 4)
    h = jnp.maximum(xc @ params["w123"].T + params["b123"], 0.0)
    y = jnp.maximum(h @ params["w4"].T + params["b4"], 0.0)
    logits = y @ params["w5"].T + params["b5"]
    probs = jax.nn.softmax(logits, axis=-1)
    return probs.reshape(2) if x.ndim == 1 else probs


if __name__ == "__main__":
    key = jax.random.PRNGKey(0)
    k_params, k_x1, k_x2 = jax.random.split(key, 3)

    params = init_params(k_params)
    flat_params = pack_params(params)

    # 1) Feature-major batched path (preferred): B=4096 -> rows=32, 2 parallel
    #    grid steps of a (2, 16, 128) block (exercises the megacore split).
    B = 4096
    x_fm = jax.random.normal(k_x1, (2, B), dtype=jnp.float32)    # feature-major
    out_fm = jax.block_until_ready(classifier_mlp_forward_fm(x_fm, flat_params))
    ref = reference_forward(x_fm.T, params)                      # (B, 2)
    assert out_fm.shape == (2, B)
    assert jnp.allclose(out_fm.T, ref, atol=1e-3, rtol=1e-3), \
        float(jnp.max(jnp.abs(out_fm.T - ref)))
    assert jnp.allclose(jnp.sum(out_fm, axis=0), 1.0, atol=1e-5)

    # 2) Ragged small batch (B=37 -> single (2, 1, 128) block, lane padding).
    Bs = 37
    xs = jax.random.normal(k_x2, (Bs, 2), dtype=jnp.float32)
    outs = jax.block_until_ready(classifier_mlp_forward(xs, params))
    refs = reference_forward(xs, params)
    assert outs.shape == (Bs, 2)
    assert jnp.allclose(outs, refs, atol=1e-3, rtol=1e-3), \
        float(jnp.max(jnp.abs(outs - refs)))

    # 3) Original single-sample API ((2,) -> (2,)), matching the PyTorch forward.
    x1 = jax.random.normal(jax.random.PRNGKey(1), (2,), dtype=jnp.float32)
    out1 = jax.block_until_ready(classifier_mlp_forward(x1, params))
    ref1 = reference_forward(x1, params)
    assert out1.shape == (2,)
    assert jnp.allclose(out1, ref1, atol=1e-3, rtol=1e-3), (out1, ref1)

    print("KERNEL_OK")
</pallas_src>

<mosaic_0001>
module attributes {stable_mosaic.version = 11 : i64} {
  func.func @_mlp_kernel(%arg0: i32, %arg1: memref<20xf32, #tpu.memory_space<smem>>, %arg2: memref<2x16x128xf32, #tpu.memory_space<vmem>>, %arg3: memref<2x16x128xf32, #tpu.memory_space<vmem>>) attributes {dimension_semantics = [#tpu.dimension_semantics<parallel>], iteration_bounds = array<i64: 2>, scalar_prefetch = 0 : i64, scratch_operands = 0 : i64, tpu.core_type = #tpu.core_type<tc>, window_params = [{transform_indices = @transform_0, window_bounds = array<i64: 20>}, {transform_indices = @transform_1, window_bounds = array<i64: 2, 16, 128>}, {transform_indices = @transform_2, window_bounds = array<i64: 2, 16, 128>}]} {
    %c0 = arith.constant 0 : index
    %c0_0 = arith.constant 0 : index
    %c0_1 = arith.constant 0 : index
    %0 = vector.load %arg2[%c0, %c0_0, %c0_1] : memref<2x16x128xf32, #tpu.memory_space<vmem>>, vector<1x16x128xf32>
    %1 = vector.shape_cast %0 : vector<1x16x128xf32> to vector<16x128xf32>
    %c1 = arith.constant 1 : index
    %c0_2 = arith.constant 0 : index
    %c0_3 = arith.constant 0 : index
    %2 = vector.load %arg2[%c1, %c0_2, %c0_3] : memref<2x16x128xf32, #tpu.memory_space<vmem>>, vector<1x16x128xf32>
    %3 = vector.shape_cast %2 : vector<1x16x128xf32> to vector<16x128xf32>
    %c6 = arith.constant 6 : index
    %4 = memref.load %arg1[%c6] : memref<20xf32, #tpu.memory_space<smem>>
    %c0_4 = arith.constant 0 : index
    %5 = memref.load %arg1[%c0_4] : memref<20xf32, #tpu.memory_space<smem>>
    %6 = vector.broadcast %5 : f32 to vector<16x128xf32>
    %7 = arith.mulf %6, %1 : vector<16x128xf32>
    %8 = vector.broadcast %4 : f32 to vector<16x128xf32>
    %9 = arith.addf %8, %7 : vector<16x128xf32>
    %c1_5 = arith.constant 1 : index
    %10 = memref.load %arg1[%c1_5] : memref<20xf32, #tpu.memory_space<smem>>
    %11 = vector.broadcast %10 : f32 to vector<16x128xf32>
    %12 = arith.mulf %11, %3 : vector<16x128xf32>
    %13 = arith.addf %9, %12 : vector<16x128xf32>
    %cst = arith.constant 0.000000e+00 : f32
    %14 = vector.broadcast %cst : f32 to vector<16x128xf32>
    %15 = arith.maximumf %13, %14 : vector<16x128xf32>
    %c7 = arith.constant 7 : index
    %16 = memref.load %arg1[%c7] : memref<20xf32, #tpu.memory_space<smem>>
    %c2 = arith.constant 2 : index
    %17 = memref.load %arg1[%c2] : memref<20xf32, #tpu.memory_space<smem>>
    %18 = vector.broadcast %17 : f32 to vector<16x128xf32>
    %19 = arith.mulf %18, %1 : vector<16x128xf32>
    %20 = vector.broadcast %16 : f32 to vector<16x128xf32>
    %21 = arith.addf %20, %19 : vector<16x128xf32>
    %c3 = arith.constant 3 : index
    %22 = memref.load %arg1[%c3] : memref<20xf32, #tpu.memory_space<smem>>
    %23 = vector.broadcast %22 : f32 to vector<16x128xf32>
    %24 = arith.mulf %23, %3 : vector<16x128xf32>
    %25 = arith.addf %21, %24 : vector<16x128xf32>
    %cst_6 = arith.constant 0.000000e+00 : f32
    %26 = vector.broadcast %cst_6 : f32 to vector<16x128xf32>
    %27 = arith.maximumf %25, %26 : vector<16x128xf32>
    %c8 = arith.constant 8 : index
    %28 = memref.load %arg1[%c8] : memref<20xf32, #tpu.memory_space<smem>>
    %c4 = arith.constant 4 : index
    %29 = memref.load %arg1[%c4] : memref<20xf32, #tpu.memory_space<smem>>
    %30 = vector.broadcast %29 : f32 to vector<16x128xf32>
    %31 = arith.mulf %30, %1 : vector<16x128xf32>
    %32 = vector.broadcast %28 : f32 to vector<16x128xf32>
    %33 = arith.addf %32, %31 : vector<16x128xf32>
    %c5 = arith.constant 5 : index
    %34 = memref.load %arg1[%c5] : memref<20xf32, #tpu.memory_space<smem>>
    %35 = vector.broadcast %34 : f32 to vector<16x128xf32>
    %36 = arith.mulf %35, %3 : vector<16x128xf32>
    %37 = arith.addf %33, %36 : vector<16x128xf32>
    %cst_7 = arith.constant 0.000000e+00 : f32
    %38 = vector.broadcast %cst_7 : f32 to vector<16x128xf32>
    %39 = arith.maximumf %37, %38 : vector<16x128xf32>
    %c15 = arith.constant 15 : index
    %40 = memref.load %arg1[%c15] : memref<20xf32, #tpu.memory_space<smem>>
    %c9 = arith.constant 9 : index
    %41 = memref.load %arg1[%c9] : memref<20xf32, #tpu.memory_space<smem>>
    %42 = vector.broadcast %41 : f32 to vector<16x128xf32>
    %43 = arith.mulf %42, %15 : vector<16x128xf32>
    %44 = vector.broadcast %40 : f32 to vector<16x128xf32>
    %45 = arith.addf %44, %43 : vector<16x128xf32>
    %c10 = arith.constant 10 : index
    %46 = memref.load %arg1[%c10] : memref<20xf32, #tpu.memory_space<smem>>
    %47 = vector.broadcast %46 : f32 to vector<16x128xf32>
    %48 = arith.mulf %47, %27 : vector<16x128xf32>
    %49 = arith.addf %45, %48 : vector<16x128xf32>
    %c11 = arith.constant 11 : index
    %50 = memref.load %arg1[%c11] : memref<20xf32, #tpu.memory_space<smem>>
    %51 = vector.broadcast %50 : f32 to vector<16x128xf32>
    %52 = arith.mulf %51, %39 : vector<16x128xf32>
    %53 = arith.addf %49, %52 : vector<16x128xf32>
    %cst_8 = arith.constant 0.000000e+00 : f32
    %54 = vector.broadcast %cst_8 : f32 to vector<16x128xf32>
    %55 = arith.maximumf %53, %54 : vector<16x128xf32>
    %c16 = arith.constant 16 : index
    %56 = memref.load %arg1[%c16] : memref<20xf32, #tpu.memory_space<smem>>
    %c12 = arith.constant 12 : index
    %57 = memref.load %arg1[%c12] : memref<20xf32, #tpu.memory_space<smem>>
    %58 = vector.broadcast %57 : f32 to vector<16x128xf32>
    %59 = arith.mulf %58, %15 : vector<16x128xf32>
    %60 = vector.broadcast %56 : f32 to vector<16x128xf32>
    %61 = arith.addf %60, %59 : vector<16x128xf32>
    %c13 = arith.constant 13 : index
    %62 = memref.load %arg1[%c13] : memref<20xf32, #tpu.memory_space<smem>>
    %63 = vector.broadcast %62 : f32 to vector<16x128xf32>
    %64 = arith.mulf %63, %27 : vector<16x128xf32>
    %65 = arith.addf %61, %64 : vector<16x128xf32>
    %c14 = arith.constant 14 : index
    %66 = memref.load %arg1[%c14] : memref<20xf32, #tpu.memory_space<smem>>
    %67 = vector.broadcast %66 : f32 to vector<16x128xf32>
    %68 = arith.mulf %67, %39 : vector<16x128xf32>
    %69 = arith.addf %65, %68 : vector<16x128xf32>
    %cst_9 = arith.constant 0.000000e+00 : f32
    %70 = vector.broadcast %cst_9 : f32 to vector<16x128xf32>
    %71 = arith.maximumf %69, %70 : vector<16x128xf32>
    %c19 = arith.constant 19 : index
    %72 = memref.load %arg1[%c19] : memref<20xf32, #tpu.memory_space<smem>>
    %c17 = arith.constant 17 : index
    %73 = memref.load %arg1[%c17] : memref<20xf32, #tpu.memory_space<smem>>
    %74 = vector.broadcast %73 : f32 to vector<16x128xf32>
    %75 = arith.mulf %74, %55 : vector<16x128xf32>
    %76 = vector.broadcast %72 : f32 to vector<16x128xf32>
    %77 = arith.addf %76, %75 : vector<16x128xf32>
    %c18 = arith.constant 18 : index
    %78 = memref.load %arg1[%c18] : memref<20xf32, #tpu.memory_space<smem>>
    %79 = vector.broadcast %78 : f32 to vector<16x128xf32>
    %80 = arith.mulf %79, %71 : vector<16x128xf32>
    %81 = arith.addf %77, %80 : vector<16x128xf32>
    %cst_10 = arith.constant 8.000000e+01 : f32
    %82 = vector.broadcast %cst_10 : f32 to vector<16x128xf32>
    %83 = arith.minimumf %81, %82 : vector<16x128xf32>
    %84 = math.exp %83 : vector<16x128xf32>
    %cst_11 = arith.constant 1.000000e+00 : f32
    %85 = vector.broadcast %cst_11 : f32 to vector<16x128xf32>
    %86 = arith.addf %85, %84 : vector<16x128xf32>
    %87 = tpu.reciprocal %86 {approx = true} : vector<16x128xf32> -> vector<16x128xf32>
    %88 = arith.mulf %86, %87 : vector<16x128xf32>
    %cst_12 = arith.constant 2.000000e+00 : f32
    %89 = vector.broadcast %cst_12 : f32 to vector<16x128xf32>
    %90 = arith.subf %89, %88 : vector<16x128xf32>
    %91 = arith.mulf %87, %90 : vector<16x128xf32>
    %c1_13 = arith.constant 1 : index
    %c0_14 = arith.constant 0 : index
    %c0_15 = arith.constant 0 : index
    %92 = vector.load %arg3[%c1_13, %c0_14, %c0_15] : memref<2x16x128xf32, #tpu.memory_space<vmem>>, vector<1x16x128xf32>
    %93 = vector.shape_cast %92 : vector<1x16x128xf32> to vector<16x128xf32>
    %94 = vector.shape_cast %91 : vector<16x128xf32> to vector<1x16x128xf32>
    tpu.vector_store %arg3[%c1_13, %c0_14, %c0_15], %94 {strides = array<i32>} : memref<2x16x128xf32, #tpu.memory_space<vmem>>, vector<1x16x128xf32>,
    %cst_16 = arith.constant 1.000000e+00 : f32
    %95 = vector.broadcast %cst_16 : f32 to vector<16x128xf32>
    %96 = arith.subf %95, %91 : vector<16x128xf32>
    %c0_17 = arith.constant 0 : index
    %c0_18 = arith.constant 0 : index
    %c0_19 = arith.constant 0 : index
    %97 = vector.load %arg3[%c0_17, %c0_18, %c0_19] : memref<2x16x128xf32, #tpu.memory_space<vmem>>, vector<1x16x128xf32>
    %98 = vector.shape_cast %97 : vector<1x16x128xf32> to vector<16x128xf32>
    %99 = vector.shape_cast %96 : vector<16x128xf32> to vector<1x16x128xf32>
    tpu.vector_store %arg3[%c0_17, %c0_18, %c0_19], %99 {strides = array<i32>} : memref<2x16x128xf32, #tpu.memory_space<vmem>>, vector<1x16x128xf32>,
    return
  }
  func.func @transform_0(%arg0: i32) -> i32 {
    %c0_i32 = arith.constant 0 : i32
    %c0_i32_0 = arith.constant 0 : i32
    return %c0_i32 : i32
  }
  func.func @transform_1(%arg0: i32) -> (i32, i32, i32) {
    %c0_i32 = arith.constant 0 : i32
    %c0_i32_0 = arith.constant 0 : i32
    %c0_i32_1 = arith.constant 0 : i32
    return %c0_i32, %arg0, %c0_i32_0 : i32, i32, i32
  }
  func.func @transform_2(%arg0: i32) -> (i32, i32, i32) {
    %c0_i32 = arith.constant 0 : i32
    %c0_i32_0 = arith.constant 0 : i32
    %c0_i32_1 = arith.constant 0 : i32
    return %c0_i32, %arg0, %c0_i32_0 : i32, i32, i32
  }
}

</mosaic_0001>

<llo_original>
// kernel: tpu_custom_call.1
$region0: #{tpu_custom_call.1}
  #allocation0 [shape = 'u32[]', space=smem, size = 0x4, offset = 0x4, fixed_abs, tag = 'smem constant byte address 0x4 - core index']
  #allocation1 [shape = 'u32[144,128]{1,0:T(1,128)}', space=vmem, size = 0x12000, scoped, tag = 'internal scratch']
  #allocation8 [shape = 's32[]', space=sflag, size = 0x4, offset = 0, fixed_abs, tag = 'sflag constant byte address 0x0 - dummy sync flag']
  #allocation10 [shape = 's32[]', space=sflag, size = 0x4, offset = 0, fixed_abs, tag = 'sflag constant byte address 0x0 - dummy sync flag']
  %s0 = inlined_call_operand.hbm [shape: f32[20], index: 0, kind: input, shape index: {}]
  %s1 = inlined_call_operand.hbm [shape: f32[2,32,128], index: 1, kind: input, shape index: {}]
  %s2 = inlined_call_operand.hbm [shape: f32[2,32,128], index: 2, kind: output, shape index: {}]
  %s3 = sld [smem:[#allocation0]]
  $region49: #{tpu_custom_call.1} parent=0
    _
  %s5 = ssub.s32 1, %s3
  %s6 = scalar_select 0, %s5, %s3
  $region1: #{tpu_custom_call.1} parent=0
    #allocation2 [shape = 'u8[512]{0}', space=smem, size = 0x200, scoped, tag = 'input window, operand 0, single buffered']
    #allocation3 [shape = 's32[2]{0}', space=sflag, size = 0x8, scoped, tag = 'scoped memory for tpu_custom_call.1']
    #allocation4 [shape = 's32[2]{0}', space=sflag, size = 0x8, scoped, tag = 'scoped memory for tpu_custom_call.1']
    #allocation5 [shape = 's32[2]{0}', space=sflag, size = 0x8, scoped, tag = 'scoped memory for tpu_custom_call.1']
    #allocation6 [shape = 'u8[32768]{0}', space=vmem, size = 0x8000, scoped, tag = 'input window, operand 1']
    #allocation7 [shape = 'u8[32768]{0}', space=vmem, size = 0x8000, scoped, tag = 'output window, operand 0']
    %7 = vsyncpa [#allocation5], 0
    %8 = vsyncpa [#allocation3], 0
    %s9 = scalar_lea.sflag [#allocation3], 1
    %10 = vsyncpa %s9, 0
    %11 = vsyncpa [#allocation4], 0
    %s12 = scalar_lea.sflag [#allocation4], 1
    %13 = vsyncpa %s12, 0
    loop: start=0, step=1, limit=4
    $region2: #{tpu_custom_call.1} parent=1 // loop_pre_header
      _
    $region3: #{tpu_custom_call.1} parent=1 // loop_header
      %s15 = sphi 0, %s19
      %p16 = scmp.ge.s32.totalorder %s15, 4
      %s23 = sphi 0, %s23
      %s25 = sphi 0, %s23
      %s26 = sphi 0, %s25
      %s40 = sphi 0, %s26
      %s46 = sphi 0, %s48
      %s49 = sphi 0, %s46
      %s50 = sphi 0, %s49
      %s66 = sphi 0, %s50
      %s72 = sphi 0, %s74
      %s75 = sphi 0, %s72
      %s76 = sphi 0, %s75
      %s92 = sphi 0, %s76
    $region4: #{tpu_custom_call.1} parent=1 // loop_header_branch
      %18 = sbr.rel (%p16) target = $region8
    $region5: #{tpu_custom_call.1} parent=1 // loop_body
      %s20 = ssub.s32 %s15, 1
      %s21 = ssub.s32 %s15, 2
      %s22 = sadd.s32 %s15, 1
      %s24 = sadd.s32 %s23, 1
      %p27 = scmp.eq.s32.totalorder %s15, 1
      %p28 = scmp.ne.s32.totalorder %s23, %s25
      %p29 = scmp.eq.s32.totalorder %s15, 0
      %p30 = por %p28, %p29
      %p31 = scmp.ne.s32.totalorder %s23, %s25
      %p32 = scmp.eq.s32.totalorder %s20, 1
      %p33 = por %p31, %p32
      %p34 = scmp.ne.s32.totalorder %s25, %s26
      %p35 = scmp.eq.s32.totalorder %s20, 0
      %p36 = por %p34, %p35
      %p37 = scmp.ne.s32.totalorder %s25, %s26
      %p38 = scmp.eq.s32.totalorder %s21, 1
      %p39 = por %p37, %p38
      %p41 = scmp.ne.s32.totalorder %s26, %s40
      %p42 = scmp.eq.s32.totalorder %s21, 0
      %p43 = por %p41, %p42
      %s44 = ssub.s32 %s15, %s22
      %p45 = scmp.eq.s32.totalorder %s44, 0
      %s47 = sadd.s32 %s46, 1
      %s48 = scalar_select %p45, %s46, %s47
      %p51 = pneg %p45
      %p52 = scmp.eq.s32.totalorder %s15, 1
      %p53 = por %p51, %p52
      %p54 = scmp.ne.s32.totalorder %s46, %s49
      %p55 = scmp.eq.s32.totalorder %s15, 0
      %p56 = por %p54, %p55
      %p57 = scmp.ne.s32.totalorder %s46, %s49
      %p58 = scmp.eq.s32.totalorder %s20, 1
      %p59 = por %p57, %p58
      %p60 = scmp.ne.s32.totalorder %s49, %s50
      %p61 = scmp.eq.s32.totalorder %s20, 0
      %p62 = por %p60, %p61
      %p63 = scmp.ne.s32.totalorder %s49, %s50
      %p64 = scmp.eq.s32.totalorder %s21, 1
      %p65 = por %p63, %p64
      %p67 = scmp.ne.s32.totalorder %s50, %s66
      %p68 = scmp.eq.s32.totalorder %s21, 0
      %p69 = por %p67, %p68
      %s70 = ssub.s32 %s15, %s22
      %p71 = scmp.eq.s32.totalorder %s70, 0
      %s73 = sadd.s32 %s72, 1
      %s74 = scalar_select %p71, %s72, %s73
      %p77 = pneg %p71
      %p78 = scmp.eq.s32.totalorder %s15, 1
      %p79 = por %p77, %p78
      %p80 = scmp.ne.s32.totalorder %s72, %s75
      %p81 = scmp.eq.s32.totalorder %s15, 0
      %p82 = por %p80, %p81
      %p83 = scmp.ne.s32.totalorder %s72, %s75
      %p84 = scmp.eq.s32.totalorder %s20, 1
      %p85 = por %p83, %p84
      %p86 = scmp.ne.s32.totalorder %s75, %s76
      %p87 = scmp.eq.s32.totalorder %s20, 0
      %p88 = por %p86, %p87
      %p89 = scmp.ne.s32.totalorder %s75, %s76
      %p90 = scmp.eq.s32.totalorder %s21, 1
      %p91 = por %p89, %p90
      %p93 = scmp.ne.s32.totalorder %s76, %s92
      %p94 = scmp.eq.s32.totalorder %s21, 0
      %p95 = por %p93, %p94
      %p96 = scmp.le.s32.totalorder 1, %s15
      %p97 = scmp.lt.s32.totalorder %s15, 3
      %p98 = pnand %p96, %p97
      %p99 = pneg %p98
      // Predicated region
      $region9: #{tpu_custom_call.1} parent=5 // pred_check
        _
      $region10: #{tpu_custom_call.1} parent=5 // pred_check_branch
        %101 = sbr.rel (%p98) target = $region12
      $region11: #{tpu_custom_call.1} parent=5 // pred_region
        %s102 = ssub.s32 %s15, 1
        // Predicated region
        $region13: #{tpu_custom_call.1} parent=11 // pred_check
          %p103 = pneg %p36
        $region14: #{tpu_custom_call.1} parent=11 // pred_check_branch
          %105 = sbr.rel (%p103) target = $region16
        $region15: #{tpu_custom_call.1} parent=11 // pred_region
          %s107 = ssub.s32 16, 16
          %108 = vsyncadd [#allocation5], %s107
          %111 = dma.hbm_to_smem %s0, 16, [#allocation2], [#allocation5]
        $region16: #{tpu_custom_call.1} parent=11 // pred_fallthru
          _
      $region12: #{tpu_custom_call.1} parent=5 // pred_fallthru
        _
      %p112 = scmp.lt.s32.totalorder %s15, 2
      // Predicated region
      $region17: #{tpu_custom_call.1} parent=5 // pred_check
        %p113 = pneg %p112
      $region18: #{tpu_custom_call.1} parent=5 // pred_check_branch
        %115 = sbr.rel (%p113) target = $region20
      $region19: #{tpu_custom_call.1} parent=5 // pred_region
        // Predicated region
        $region21: #{tpu_custom_call.1} parent=19 // pred_check
          %p116 = pneg %p56
        $region22: #{tpu_custom_call.1} parent=19 // pred_check_branch
          %118 = sbr.rel (%p116) target = $region24
        $region23: #{tpu_custom_call.1} parent=19 // pred_region
          #allocation9 [shape = 'u32[6]{0}', space=smem, size = 0x18, scoped, tag = 'DMA stride descriptor']
          %s119 = sand.u32 %s46, 1
          %s120 = scalar_lea.sflag [#allocation3], %s119
          %s121 = sand.u32 %s46, 1
          %s122 = smul.addr %s121, 32
          %s123 = scalar_lea.vmem [#allocation6], %s122
          %s124 = smul.u32 2, %s15
          %s126 = ssub.s32 512, 512
          %127 = vsyncadd %s120, %s126
          %s128 = smul.addr %s124, 128
          %s129 = scalar_lea.hbm %s1, %s128
          %s131 = sshll.u32 1, 14
          %s132 = sxor.u32 4294967295, %s131
          %s134 = sld [smem:[#allocation0]]
          %s135 = sadd.s32 2, %s134
          %s137 = sshll.u32 7, 26
          %s138 = sxor.u32 4294967295, %s137
          %s139 = sand.u32 0, %s138
          %s140 = sshll.u32 %s135, 26
          %s141 = sor.u32 %s139, %s140
          %s142 = sshll.u32 %s123, 4
          %s143 = int_to_ptr.vmem [resolvable:$true] %s142
          %149 = sst [smem:[#allocation9]] 512
          %s150 = scalar_lea.smem [#allocation9], 1
          %151 = sst [smem:[%s150]] 256
          %s152 = scalar_lea.smem [#allocation9], 2
          %153 = sst [smem:[%s152]] 2
          %s154 = scalar_lea.smem [#allocation9], 3
          %155 = sst [smem:[%s154]] 128
          %s156 = scalar_lea.smem [#allocation9], 4
          %157 = sst [smem:[%s156]] 128
          %s158 = scalar_lea.smem [#allocation9], 5
          %159 = sst [smem:[%s158]] 8
          %161 = dma.general %s129, 512, %s143, %s120, 131072, [#allocation9], %s141, 0
        $region24: #{tpu_custom_call.1} parent=19 // pred_fallthru
          _
      $region20: #{tpu_custom_call.1} parent=5 // pred_fallthru
        _
      %p162 = scmp.le.s32.totalorder 1, %s15
      %p163 = scmp.lt.s32.totalorder %s15, 3
      %p164 = pnand %p162, %p163
      %p165 = pneg %p164
      // Predicated region
      $region25: #{tpu_custom_call.1} parent=5 // pred_check
        _
      $region26: #{tpu_custom_call.1} parent=5 // pred_check_branch
        %167 = sbr.rel (%p164) target = $region28
      $region27: #{tpu_custom_call.1} parent=5 // pred_region
        %s168 = ssub.s32 %s15, 1
        // Predicated region
        $region29: #{tpu_custom_call.1} parent=27 // pred_check
          %p169 = pneg %p36
        $region30: #{tpu_custom_call.1} parent=27 // pred_check_branch
          %171 = sbr.rel (%p169) target = $region32
        $region31: #{tpu_custom_call.1} parent=27 // pred_region
          %172 = dma.done [#allocation5], 16
        $region32: #{tpu_custom_call.1} parent=27 // pred_fallthru
          _
        %s173 = sand.u32 %s49, 1
        %s174 = scalar_lea.sflag [#allocation3], %s173
        %s175 = sand.u32 %s49, 1
        %s176 = smul.addr %s175, 32
        %s177 = scalar_lea.vmem [#allocation6], %s176
        // Predicated region
        $region33: #{tpu_custom_call.1} parent=27 // pred_check
          %p178 = pneg %p62
        $region34: #{tpu_custom_call.1} parent=27 // pred_check_branch
          %180 = sbr.rel (%p178) target = $region36
        $region35: #{tpu_custom_call.1} parent=27 // pred_region
          %181 = dma.done %s174, 512
        $region36: #{tpu_custom_call.1} parent=27 // pred_fallthru
          _
        %182 = sfence
        %p183 = pneg %p36
        %p184 = pneg %p33
        %s185 = sand.u32 %s49, 1
        %s186 = scalar_lea.sflag [#allocation3], %s185
        %s187 = sand.u32 %s49, 1
        %s188 = smul.addr %s187, 32
        %s189 = scalar_lea.vmem [#allocation6], %s188
        %p190 = pneg %p62
        %p191 = pneg %p59
        %p192 = pneg %p88
        %p193 = pneg %p85
        %s194 = sand.u32 %s75, 1
        %s195 = scalar_lea.sflag [#allocation4], %s194
        %s196 = sand.u32 %s75, 1
        %s197 = smul.addr %s196, 32
        %s198 = scalar_lea.vmem [#allocation7], %s197
        %s199 = smul.u32 2, %s20
        %s200 = smul.u32 2, %s20
        %v201 = vld [vmem:[%s177] sm:$0xff]
        %v202 = vld [vmem:[%s177 + $0x8] sm:$0xff]
        %s203 = scalar_lea.vmem %s177, 16 [#allocation6]
        %v204 = vld [vmem:[%s203] sm:$0xff]
        %v205 = vld [vmem:[%s203 + $0x8] sm:$0xff]
        %s206 = sld [smem:[#allocation2 + $0x6]]
        %s207 = sld [smem:[#allocation2]]
        %v208 = vstv %s207
        %v209 = vmul.f32 %v208, %v201
        %v210 = vmul.f32 %v208, %v202
        %v211 = vstv %s206
        %v212 = vadd.f32 %v211, %v209
        %v213 = vadd.f32 %v211, %v210
        %s214 = sld [smem:[#allocation2 + $0x1]]
        %v215 = vstv %s214
        %v216 = vmul.f32 %v215, %v204
        %v217 = vmul.f32 %v215, %v205
        %v218 = vadd.f32 %v212, %v216
        %v219 = vadd.f32 %v213, %v217
        %v220 = vmax.f32 %v218, 0.0
        %v221 = vmax.f32 %v219, 0.0
        %s222 = sld [smem:[#allocation2 + $0x7]]
        %s223 = sld [smem:[#allocation2 + $0x2]]
        %v224 = vstv %s223
        %v225 = vmul.f32 %v224, %v201
        %v226 = vmul.f32 %v224, %v202
        %v227 = vstv %s222
        %v228 = vadd.f32 %v227, %v225
        %v229 = vadd.f32 %v227, %v226
        %s230 = sld [smem:[#allocation2 + $0x3]]
        %v231 = vstv %s230
        %v232 = vmul.f32 %v231, %v204
        %v233 = vmul.f32 %v231, %v205
        %v234 = vadd.f32 %v228, %v232
        %v235 = vadd.f32 %v229, %v233
        %v236 = vmax.f32 %v234, 0.0
        %v237 = vmax.f32 %v235, 0.0
        %s238 = sld [smem:[#allocation2 + $0x8]]
        %s239 = sld [smem:[#allocation2 + $0x4]]
        %v240 = vstv %s239
        %v241 = vmul.f32 %v240, %v201
        %v242 = vmul.f32 %v240, %v202
        %v243 = vstv %s238
        %v244 = vadd.f32 %v243, %v241
        %v245 = vadd.f32 %v243, %v242
        %s246 = sld [smem:[#allocation2 + $0x5]]
        %v247 = vstv %s246
        %v248 = vmul.f32 %v247, %v204
        %v249 = vmul.f32 %v247, %v205
        %v250 = vadd.f32 %v244, %v248
        %v251 = vadd.f32 %v245, %v249
        %v252 = vmax.f32 %v250, 0.0
        %v253 = vmax.f32 %v251, 0.0
        %s254 = sld [smem:[#allocation2 + $0xf]]
        %s255 = sld [smem:[#allocation2 + $0x9]]
        %v256 = vstv %s255
        %v257 = vmul.f32 %v256, %v220
        %v258 = vmul.f32 %v256, %v221
        %v259 = vstv %s254
        %v260 = vadd.f32 %v259, %v257
        %v261 = vadd.f32 %v259, %v258
        %s262 = sld [smem:[#allocation2 + $0xa]]
        %v263 = vstv %s262
        %v264 = vmul.f32 %v263, %v236
        %v265 = vmul.f32 %v263, %v237
        %v266 = vadd.f32 %v260, %v264
        %v267 = vadd.f32 %v261, %v265
        %s268 = sld [smem:[#allocation2 + $0xb]]
        %v269 = vstv %s268
        %v270 = vmul.f32 %v269, %v252
        %v271 = vmul.f32 %v269, %v253
        %v272 = vadd.f32 %v266, %v270
        %v273 = vadd.f32 %v267, %v271
        %v274 = vmax.f32 %v272, 0.0
        %v275 = vmax.f32 %v273, 0.0
        %s276 = sld [smem:[#allocation2 + $0x10]]
        %s277 = sld [smem:[#allocation2 + $0xc]]
        %v278 = vstv %s277
        %v279 = vmul.f32 %v278, %v220
        %v280 = vmul.f32 %v278, %v221
        %v281 = vstv %s276
        %v282 = vadd.f32 %v281, %v279
        %v283 = vadd.f32 %v281, %v280
        %s284 = sld [smem:[#allocation2 + $0xd]]
        %v285 = vstv %s284
        %v286 = vmul.f32 %v285, %v236
        %v287 = vmul.f32 %v285, %v237
        %v288 = vadd.f32 %v282, %v286
        %v289 = vadd.f32 %v283, %v287
        %s290 = sld [smem:[#allocation2 + $0xe]]
        %v291 = vstv %s290
        %v292 = vmul.f32 %v291, %v252
        %v293 = vmul.f32 %v291, %v253
        %v294 = vadd.f32 %v288, %v292
        %v295 = vadd.f32 %v289, %v293
        %v296 = vmax.f32 %v294, 0.0
        %v297 = vmax.f32 %v295, 0.0
        %s298 = sld [smem:[#allocation2 + $0x13]]
        %s299 = sld [smem:[#allocation2 + $0x11]]
        %v300 = vstv %s299
        %v301 = vmul.f32 %v300, %v274
        %v302 = vmul.f32 %v300, %v275
        %v303 = vstv %s298
        %v304 = vadd.f32 %v303, %v301
        %v305 = vadd.f32 %v303, %v302
        %s306 = sld [smem:[#allocation2 + $0x12]]
        %v307 = vstv %s306
        %v308 = vmul.f32 %v307, %v296
        %v309 = vmul.f32 %v307, %v297
        %v310 = vadd.f32 %v304, %v308
        %v311 = vadd.f32 %v305, %v309
        %v312 = vmin.f32 %v310, 80.0
        %v313 = vmin.f32 %v311, 80.0
        %v314 = vmul.f32 %v312, 1.442695
        %v315 = vpow.pop %v314
        %v316 = vmul.f32 %v313, 1.442695
        %v317 = vpow.pop %v316
        %v318 = vadd.f32 %v315, 1.0
        %v319 = vadd.f32 %v317, 1.0
        %v320 = vrcp.pop %v318
        %v321 = vrcp.pop %v319
        %v322 = vmul.f32 %v318, %v320
        %v323 = vmul.f32 %v319, %v321
        %v324 = vsub.f32 2.0, %v322
        %v325 = vsub.f32 2.0, %v323
        %v326 = vmul.f32 %v320, %v324
        %v327 = vmul.f32 %v321, %v325
        %s328 = scalar_lea.vmem %s198, 16 [#allocation7]
        %329 = vst [vmem:[%s328] sm:$0xff] %v326
        %330 = vst [vmem:[%s328 + $0x8] sm:$0xff] %v327
        %v331 = vsub.f32 1.0, %v326
        %v332 = vsub.f32 1.0, %v327
        %333 = vst [vmem:[%s198] sm:$0xff] %v331
        %334 = vst [vmem:[%s198 + $0x8] sm:$0xff] %v332
        %s335 = sand.u32 %s75, 1
        %s336 = scalar_lea.sflag [#allocation4], %s335
        %s337 = sand.u32 %s75, 1
        %s338 = smul.addr %s337, 32
        %s339 = scalar_lea.vmem [#allocation7], %s338
        // Predicated region
        $region37: #{tpu_custom_call.1} parent=27 // pred_check
          %p340 = pneg %p85
        $region38: #{tpu_custom_call.1} parent=27 // pred_check_branch
          %342 = sbr.rel (%p340) target = $region40
        $region39: #{tpu_custom_call.1} parent=27 // pred_region
          #allocation11 [shape = 'u32[6]{0}', space=smem, size = 0x18, scoped, tag = 'DMA stride descriptor']
          %s343 = smul.u32 2, %s20
          %s345 = ssub.s32 512, 512
          %346 = vsyncadd %s336, %s345
          %s347 = smul.addr %s343, 128
          %s348 = scalar_lea.hbm %s2, %s347
          %s350 = sshll.u32 1, 14
          %s351 = sxor.u32 4294967295, %s350
          %s354 = sshll.u32 7, 18
          %s355 = sxor.u32 4294967295, %s354
          %s356 = sand.u32 0, %s355
          %s358 = sor.u32 %s356, 0
          %s359 = sshll.u32 %s339, 4
          %s360 = int_to_ptr.vmem [resolvable:$true] %s359
          %366 = sst [smem:[#allocation11]] 256
          %s367 = scalar_lea.smem [#allocation11], 1
          %368 = sst [smem:[%s367]] 512
          %s369 = scalar_lea.smem [#allocation11], 2
          %370 = sst [smem:[%s369]] 2
          %s371 = scalar_lea.smem [#allocation11], 3
          %372 = sst [smem:[%s371]] 128
          %s373 = scalar_lea.smem [#allocation11], 4
          %374 = sst [smem:[%s373]] 128
          %s375 = scalar_lea.smem [#allocation11], 5
          %376 = sst [smem:[%s375]] 8
          %378 = dma.general %s360, 512, %s348, %s336, 131072, [#allocation11], %s358, 0
        $region40: #{tpu_custom_call.1} parent=27 // pred_fallthru
          _
      $region28: #{tpu_custom_call.1} parent=5 // pred_fallthru
        _
      %p379 = scmp.le.s32.totalorder 2, %s15
      // Predicated region
      $region41: #{tpu_custom_call.1} parent=5 // pred_check
        %p380 = pneg %p379
      $region42: #{tpu_custom_call.1} parent=5 // pred_check_branch
        %382 = sbr.rel (%p380) target = $region44
      $region43: #{tpu_custom_call.1} parent=5 // pred_region
        %s383 = ssub.s32 %s15, 2
        // Predicated region
        $region45: #{tpu_custom_call.1} parent=43 // pred_check
          %p384 = pneg %p91
        $region46: #{tpu_custom_call.1} parent=43 // pred_check_branch
          %386 = sbr.rel (%p384) target = $region48
        $region47: #{tpu_custom_call.1} parent=43 // pred_region
          %s387 = sand.u32 %s76, 1
          %s388 = scalar_lea.sflag [#allocation4], %s387
          %s389 = sand.u32 %s76, 1
          %s390 = smul.addr %s389, 32
          %s391 = scalar_lea.vmem [#allocation7], %s390
          %392 = dma.done %s388, 512
        $region48: #{tpu_custom_call.1} parent=43 // pred_fallthru
          _
      $region44: #{tpu_custom_call.1} parent=5 // pred_fallthru
        _
    $region6: #{tpu_custom_call.1} parent=1 // loop_footer
      %s19 = sadd.s32 1, %s15
    $region7: #{tpu_custom_call.1} parent=1 // loop_footer_branch
      %14 = sbr.rel target = $region3
    $region8: #{tpu_custom_call.1} parent=1 // loop_exit
      _
    %393 = vsyncpa [#allocation3], 1
    %s394 = scalar_lea.sflag [#allocation3], 1
    %395 = vsyncpa %s394, 1
    %396 = vsyncpa [#allocation4], 1
    %s397 = scalar_lea.sflag [#allocation4], 1
    %398 = vsyncpa %s397, 1
    %399 = vsyncpa [#allocation5], 1
    %s400 = scalar_lea.sflag [#allocation5], 1
    %401 = vsyncpa %s400, 1

</llo_original>
